<compile_context>
chip_gen: v6e
topology: v6e:2x2x1
jax: 0.10.0
libtpu: 0.0.40
codegen_flags: <defaults>
</compile_context>

<pallas_src>
import functools

import jax
import jax.numpy as jnp
from jax import lax
from jax.experimental import pallas as pl
from jax.experimental.pallas import tpu as pltpu


def _ridge_mse_kernel_fused(x_ref, y_ref, w_ref, b_ref, sse_ref):
    """Resident-W path: grid = (num_m,), no K axis, no accumulator.

    x_ref : (TM, D)        input tile (native dtype, fed straight to the MXU)
    y_ref : (TM, D)        target tile
    w_ref : (D, D)         weight in PyTorch (out, in) layout (constant block)
    b_ref : (1, D)         bias
    sse_ref : (1, 8, 128)  per-M-tile partial SSE, value replicated over block
    """
    pred = lax.dot_general(
        x_ref[...], w_ref[...],
        dimension_numbers=(((1,), (1,)), ((), ())),   # x @ W.T, f32 MXU acc
        preferred_element_type=jnp.float32,
    ) + b_ref[...].astype(jnp.float32)
    diff = pred - y_ref[...].astype(jnp.float32)
    sse_ref[...] = jnp.broadcast_to(jnp.sum(diff * diff), sse_ref.shape)


def _ridge_mse_kernel_ktiled(x_ref, y_ref, w_ref, b_ref, sse_ref, acc_ref):
    """K-tiled path: grid = (num_m, num_k), reduction (K) axis last.

    x_ref : (TM, TK)       input tile
    y_ref : (TM, D)        target tile (resident while the M index is fixed)
    w_ref : (D, TK)        weight slice, PyTorch (out, in) layout
    b_ref : (1, D)         bias
    sse_ref : (1, 8, 128)  per-M-tile partial SSE (written only on last K step)
    acc_ref : VMEM (TM, D) f32 accumulator over the K (d_model_in) axis
    """
    # All grid-position reads hoisted to kernel top level (never inside pl.when).
    k = pl.program_id(1)
    nk = pl.num_programs(1)

    part = lax.dot_general(
        x_ref[...], w_ref[...],
        dimension_numbers=(((1,), (1,)), ((), ())),
        preferred_element_type=jnp.float32,
    )

    # Direct write on the first K step (saves the zero-init store + read-add).
    @pl.when(k == 0)
    def _():
        acc_ref[...] = part

    @pl.when(k > 0)
    def _():
        acc_ref[...] += part

    # Fused f32 epilogue only on the final K step.
    @pl.when(k == nk - 1)
    def _():
        pred = acc_ref[...] + b_ref[...].astype(jnp.float32)
        diff = pred - y_ref[...].astype(jnp.float32)
        sse_ref[...] = jnp.broadcast_to(jnp.sum(diff * diff), sse_ref.shape)


def _largest_aligned_divisor(n, align, cap):
    """Largest divisor of n that is a multiple of `align` and <= cap, else None."""
    hi = (min(n, cap) // align) * align
    for c in range(hi, 0, -align):
        if n % c == 0:
            return c
    return None


def ridge_regression_loss(x, y, weight, bias, *, tm=None, tk=None,
                          use_bf16_operands=False):
    """x: (B, D), y: (B, D), weight: (D, D) PyTorch (out, in) layout, bias: (D,)."""
    B, D = x.shape
    assert y.shape == (B, D) and weight.shape == (D, D) and bias.shape == (D,)

    if use_bf16_operands:
        # Optional: full-rate MXU + halved x/W bytes; accumulation stays f32.
        x = x.astype(jnp.bfloat16)
        weight = weight.astype(jnp.bfloat16)
    itemsize = jnp.dtype(x.dtype).itemsize

    # Tile heuristics: largest aligned divisors, capped at MXU-friendly sizes.
    if tm is None:
        tm = _largest_aligned_divisor(B, 8, 256) or B
    if tk is None:
        if 2 * D * D * itemsize <= (16 << 20):   # double-buffered resident W budget
            tk = D
        else:
            tk = _largest_aligned_divisor(D, 128, 1024) or D
    # TODO(synk): pad B/D instead of asserting when explicit tiles don't divide.
    assert B % tm == 0 and D % tk == 0, (B, D, tm, tk)
    num_m, num_k = B // tm, D // tk

    b2d = bias.reshape(1, D)

    # Lane-dense per-M-tile partial SSE output: block (1, 8, 128), value
    # replicated; wrapper reads [:, 0, 0].  Blocked per i so the M axis can be
    # "parallel" (each core writes back only its own blocks).
    out_shape = jax.ShapeDtypeStruct((num_m, 8, 128), jnp.float32)

    if num_k == 1:
        grid = (num_m,)
        in_specs = [
            pl.BlockSpec((tm, D), lambda i: (i, 0)),     # x
            pl.BlockSpec((tm, D), lambda i: (i, 0)),     # y
            pl.BlockSpec((D, D), lambda i: (0, 0)),      # W resident (fetched once)
            pl.BlockSpec((1, D), lambda i: (0, 0)),      # bias
        ]
        out_spec = pl.BlockSpec((1, 8, 128), lambda i: (i, 0, 0))
        scratch = []
        kernel = _ridge_mse_kernel_fused
        dim_sem = ("parallel",)
        vmem_needed = itemsize * (2 * tm * D + 2 * D * D + 2 * tm * D + 2 * D) \
            + 2 * 8 * 128 * 4
        bytes_accessed = itemsize * (2 * B * D + D * D + D) + num_m * 8 * 128 * 4
    else:
        grid = (num_m, num_k)                            # reduction (K) axis last
        in_specs = [
            pl.BlockSpec((tm, tk), lambda i, k: (i, k)),  # x
            pl.BlockSpec((tm, D), lambda i, k: (i, 0)),   # y (resident per M tile)
            pl.BlockSpec((D, tk), lambda i, k: (0, k)),   # W, (out, in) layout
            pl.BlockSpec((1, D), lambda i, k: (0, 0)),    # bias
        ]
        out_spec = pl.BlockSpec((1, 8, 128), lambda i, k: (i, 0, 0))
        scratch = [pltpu.VMEM((tm, D), jnp.float32)]
        kernel = _ridge_mse_kernel_ktiled
        dim_sem = ("parallel", "arbitrary")
        vmem_needed = itemsize * (2 * tm * tk + 2 * D * tk + 2 * tm * D + 2 * D) \
            + tm * D * 4 + 2 * 8 * 128 * 4
        # W is re-streamed once per M tile on this path.
        bytes_accessed = itemsize * (2 * B * D + num_m * D * D + num_m * D) \
            + num_m * 8 * 128 * 4

    vmem_limit = int(min(100 << 20,
                         max(32 << 20, vmem_needed + (vmem_needed >> 2) + (4 << 20))))

    partial_sse = pl.pallas_call(
        kernel,
        out_shape=out_shape,
        grid_spec=pltpu.PrefetchScalarGridSpec(
            num_scalar_prefetch=0,
            grid=grid,
            in_specs=in_specs,
            out_specs=out_spec,
            scratch_shapes=scratch,
        ),
        compiler_params=pltpu.CompilerParams(
            dimension_semantics=dim_sem,
            vmem_limit_bytes=vmem_limit,
        ),
        cost_estimate=pl.CostEstimate(
            flops=int(2 * B * D * D),
            transcendentals=0,
            bytes_accessed=int(bytes_accessed),
        ),
    )(x, y, weight, b2d)

    # Final f32 reduction over per-tile partials + MSE 'mean' normalization.
    return jnp.sum(partial_sse[:, 0, 0]) / jnp.float32(B * D)


if __name__ == "__main__":
    # Small, lane-aligned shapes (module default d_model=512; use 256 here).
    B, D = 32, 256
    key = jax.random.PRNGKey(0)
    kx, ky, kw, kb = jax.random.split(key, 4)

    x = jax.random.normal(kx, (B, D), dtype=jnp.float32)
    y = jax.random.normal(ky, (B, D), dtype=jnp.float32)

    # nn.Linear-style uniform init, bound = 1/sqrt(fan_in); PyTorch (out, in) layout.
    bound = 1.0 / (D ** 0.5)
    weight = jax.random.uniform(kw, (D, D), minval=-bound, maxval=bound,
                                dtype=jnp.float32)
    bias = jax.random.uniform(kb, (D,), minval=-bound, maxval=bound,
                              dtype=jnp.float32)

    # Plain-JAX reference.
    ref = jnp.mean((x @ weight.T + bias - y) ** 2)

    # Path 1: resident-W fused kernel (tk == D, no K axis / accumulator).
    loss_fused_fn = jax.jit(functools.partial(ridge_regression_loss, tm=8, tk=D))
    # Path 2: K-tiled accumulator kernel (num_k == 2, multiple M tiles).
    loss_ktiled_fn = jax.jit(functools.partial(ridge_regression_loss, tm=8, tk=128))

    loss_fused = loss_fused_fn(x, y, weight, bias)
    loss_ktiled = loss_ktiled_fn(x, y, weight, bias)
    loss_fused, loss_ktiled = jax.block_until_ready((loss_fused, loss_ktiled))

    assert jnp.allclose(loss_fused, ref, rtol=1e-4, atol=1e-5), (loss_fused, ref)
    assert jnp.allclose(loss_ktiled, ref, rtol=1e-4, atol=1e-5), (loss_ktiled, ref)

    print("KERNEL_OK")
</pallas_src>

<mosaic_0001>
module attributes {stable_mosaic.version = 11 : i64} {
  func.func @_ridge_mse_kernel_fused(%arg0: i32, %arg1: memref<8x256xf32, #tpu.memory_space<vmem>>, %arg2: memref<8x256xf32, #tpu.memory_space<vmem>>, %arg3: memref<256x256xf32, #tpu.memory_space<vmem>>, %arg4: memref<1x256xf32, #tpu.memory_space<vmem>>, %arg5: memref<1x8x128xf32, #tpu.memory_space<vmem>>) attributes {dimension_semantics = [#tpu.dimension_semantics<parallel>], iteration_bounds = array<i64: 4>, scalar_prefetch = 0 : i64, scratch_operands = 0 : i64, tpu.core_type = #tpu.core_type<tc>, window_params = [{transform_indices = @transform_0, window_bounds = array<i64: 8, 256>}, {transform_indices = @transform_1, window_bounds = array<i64: 8, 256>}, {pipeline_mode = #tpu.pipeline_mode<synchronous>, transform_indices = @transform_2, window_bounds = array<i64: 256, 256>}, {pipeline_mode = #tpu.pipeline_mode<synchronous>, transform_indices = @transform_3, window_bounds = array<i64: 1, 256>}, {transform_indices = @transform_4, window_bounds = array<i64: 1, 8, 128>}]} {
    %c0 = arith.constant 0 : index
    %c0_0 = arith.constant 0 : index
    %0 = vector.load %arg1[%c0, %c0_0] : memref<8x256xf32, #tpu.memory_space<vmem>>, vector<8x256xf32>
    %c0_1 = arith.constant 0 : index
    %c0_2 = arith.constant 0 : index
    %1 = vector.load %arg3[%c0_1, %c0_2] : memref<256x256xf32, #tpu.memory_space<vmem>>, vector<256x256xf32>
    %cst = arith.constant dense<0.000000e+00> : vector<8x256xf32>
    %2 = tpu.matmul %0, %1, %cst {dimension_numbers = #tpu.dot_dimension_numbers<[1], [1], [0], [0], [0, 0, 1, 0], [], []>} : vector<8x256xf32>, vector<256x256xf32>, vector<8x256xf32> -> vector<8x256xf32>
    %c0_3 = arith.constant 0 : index
    %c0_4 = arith.constant 0 : index
    %3 = vector.load %arg4[%c0_3, %c0_4] : memref<1x256xf32, #tpu.memory_space<vmem>>, vector<1x256xf32>
    %4 = vector.broadcast %3 : vector<1x256xf32> to vector<8x256xf32>
    %5 = arith.addf %2, %4 : vector<8x256xf32>
    %c0_5 = arith.constant 0 : index
    %c0_6 = arith.constant 0 : index
    %6 = vector.load %arg2[%c0_5, %c0_6] : memref<8x256xf32, #tpu.memory_space<vmem>>, vector<8x256xf32>
    %7 = arith.subf %5, %6 : vector<8x256xf32>
    %8 = arith.mulf %7, %7 : vector<8x256xf32>
    %9 = vector.shape_cast %8 : vector<8x256xf32> to vector<1x8x256xf32>
    %cst_7 = arith.constant dense<0.000000e+00> : vector<1xf32>
    %10 = vector.multi_reduction <add>, %9, %cst_7 [1, 2] : vector<1x8x256xf32> to vector<1xf32>
    %11 = vector.shape_cast %10 : vector<1xf32> to vector<1x1x1xf32>
    %12 = vector.extract %11[0, 0, 0] : f32 from vector<1x1x1xf32>
    %13 = vector.broadcast %12 : f32 to vector<1x8x128xf32>
    %c0_8 = arith.constant 0 : index
    %c0_9 = arith.constant 0 : index
    %c0_10 = arith.constant 0 : index
    %14 = vector.load %arg5[%c0_8, %c0_9, %c0_10] : memref<1x8x128xf32, #tpu.memory_space<vmem>>, vector<1x8x128xf32>
    tpu.vector_store %arg5[%c0_8, %c0_9, %c0_10], %13 {strides = array<i32>} : memref<1x8x128xf32, #tpu.memory_space<vmem>>, vector<1x8x128xf32>,
    return
  }
  func.func @transform_0(%arg0: i32) -> (i32, i32) {
    %c0_i32 = arith.constant 0 : i32
    %c0_i32_0 = arith.constant 0 : i32
    return %arg0, %c0_i32 : i32, i32
  }
  func.func @transform_1(%arg0: i32) -> (i32, i32) {
    %c0_i32 = arith.constant 0 : i32
    %c0_i32_0 = arith.constant 0 : i32
    return %arg0, %c0_i32 : i32, i32
  }
  func.func @transform_2(%arg0: i32) -> (i32, i32) {
    %c0_i32 = arith.constant 0 : i32
    %c0_i32_0 = arith.constant 0 : i32
    %c0_i32_1 = arith.constant 0 : i32
    return %c0_i32, %c0_i32_0 : i32, i32
  }
  func.func @transform_3(%arg0: i32) -> (i32, i32) {
    %c0_i32 = arith.constant 0 : i32
    %c0_i32_0 = arith.constant 0 : i32
    %c0_i32_1 = arith.constant 0 : i32
    return %c0_i32, %c0_i32_0 : i32, i32
  }
  func.func @transform_4(%arg0: i32) -> (i32, i32, i32) {
    %c0_i32 = arith.constant 0 : i32
    %c0_i32_0 = arith.constant 0 : i32
    %c0_i32_1 = arith.constant 0 : i32
    return %arg0, %c0_i32, %c0_i32_0 : i32, i32, i32
  }
}

</mosaic_0001>

<llo_original>
// kernel: ridge_regression_loss.1
$region0: #{ridge_regression_loss.1}
  #allocation0 [shape = 'u32[]', space=smem, size = 0x4, offset = 0x4, fixed_abs, tag = 'smem constant byte address 0x4 - core index']
  #allocation1 [shape = 'u32[144,128]{1,0:T(1,128)}', space=vmem, size = 0x12000, scoped, tag = 'internal scratch']
  %s0 = inlined_call_operand.hbm [shape: f32[32,256], index: 0, kind: input, shape index: {}]
  %s1 = inlined_call_operand.hbm [shape: f32[32,256], index: 1, kind: input, shape index: {}]
  %s2 = inlined_call_operand.hbm [shape: f32[256,256], index: 2, kind: input, shape index: {}]
  %s3 = inlined_call_operand.vmem [shape: f32[1,256], index: 3, kind: input, shape index: {}]
  %s4 = inlined_call_operand.vmem [shape: f32[4,8,128], index: 4, kind: output, shape index: {}]
  %s5 = sld [smem:[#allocation0]]
  $region61: #{ridge_regression_loss.1} parent=0
    _
  %s7 = ssub.s32 1, %s5
  %s8 = scalar_select 0, %s7, %s5
  $region1: #{ridge_regression_loss.1} parent=0
    #allocation2 [shape = 'u8[16384]{0}', space=vmem, size = 0x4000, scoped, tag = 'input window, operand 0']
    #allocation3 [shape = 's32[2]{0}', space=sflag, size = 0x8, scoped, tag = 'scoped memory for ridge_regression_loss.1']
    #allocation4 [shape = 'u8[16384]{0}', space=vmem, size = 0x4000, scoped, tag = 'input window, operand 1']
    #allocation5 [shape = 's32[2]{0}', space=sflag, size = 0x8, scoped, tag = 'scoped memory for ridge_regression_loss.1']
    #allocation6 [shape = 'u8[262144]{0}', space=vmem, size = 0x40000, scoped, tag = 'input window, operand 2, single buffered']
    %9 = vsyncpa [#allocation3], 0
    %s10 = scalar_lea.sflag [#allocation3], 1
    %11 = vsyncpa %s10, 0
    %12 = vsyncpa [#allocation5], 0
    %s13 = scalar_lea.sflag [#allocation5], 1
    %14 = vsyncpa %s13, 0
    loop: start=0, step=1, limit=6
    $region2: #{ridge_regression_loss.1} parent=1 // loop_pre_header
      _
    $region3: #{ridge_regression_loss.1} parent=1 // loop_header
      %s16 = sphi 0, %s20
      %p17 = scmp.ge.s32.totalorder %s16, 6
      %s26 = sphi 0, %s28
      %s29 = sphi 0, %s26
      %s30 = sphi 0, %s29
      %s46 = sphi 0, %s30
      %s52 = sphi 0, %s54
      %s55 = sphi 0, %s52
      %s56 = sphi 0, %s55
      %s72 = sphi 0, %s56
      %s76 = sphi 0, %s76
      %s78 = sphi 0, %s76
      %s79 = sphi 0, %s78
      %s93 = sphi 0, %s79
      %s97 = sphi 0, %s97
      %s99 = sphi 0, %s97
      %s100 = sphi 0, %s99
      %s114 = sphi 0, %s100
      %s120 = sphi 0, %s122
      %s123 = sphi 0, %s120
      %s124 = sphi 0, %s123
      %s140 = sphi 0, %s124
    $region4: #{ridge_regression_loss.1} parent=1 // loop_header_branch
      %19 = sbr.rel (%p17) target = $region8
    $region5: #{ridge_regression_loss.1} parent=1 // loop_body
      %s21 = ssub.s32 %s16, 1
      %s22 = ssub.s32 %s16, 2
      %s23 = sadd.s32 %s16, 1
      %s24 = ssub.s32 %s16, %s23
      %p25 = scmp.eq.s32.totalorder %s24, 0
      %s27 = sadd.s32 %s26, 1
      %s28 = scalar_select %p25, %s26, %s27
      %p31 = pneg %p25
      %p32 = scmp.eq.s32.totalorder %s16, 3
      %p33 = por %p31, %p32
      %p34 = scmp.ne.s32.totalorder %s26, %s29
      %p35 = scmp.eq.s32.totalorder %s16, 0
      %p36 = por %p34, %p35
      %p37 = scmp.ne.s32.totalorder %s26, %s29
      %p38 = scmp.eq.s32.totalorder %s21, 3
      %p39 = por %p37, %p38
      %p40 = scmp.ne.s32.totalorder %s29, %s30
      %p41 = scmp.eq.s32.totalorder %s21, 0
      %p42 = por %p40, %p41
      %p43 = scmp.ne.s32.totalorder %s29, %s30
      %p44 = scmp.eq.s32.totalorder %s22, 3
      %p45 = por %p43, %p44
      %p47 = scmp.ne.s32.totalorder %s30, %s46
      %p48 = scmp.eq.s32.totalorder %s22, 0
      %p49 = por %p47, %p48
      %s50 = ssub.s32 %s16, %s23
      %p51 = scmp.eq.s32.totalorder %s50, 0
      %s53 = sadd.s32 %s52, 1
      %s54 = scalar_select %p51, %s52, %s53
      %p57 = pneg %p51
      %p58 = scmp.eq.s32.totalorder %s16, 3
      %p59 = por %p57, %p58
      %p60 = scmp.ne.s32.totalorder %s52, %s55
      %p61 = scmp.eq.s32.totalorder %s16, 0
      %p62 = por %p60, %p61
      %p63 = scmp.ne.s32.totalorder %s52, %s55
      %p64 = scmp.eq.s32.totalorder %s21, 3
      %p65 = por %p63, %p64
      %p66 = scmp.ne.s32.totalorder %s55, %s56
      %p67 = scmp.eq.s32.totalorder %s21, 0
      %p68 = por %p66, %p67
      %p69 = scmp.ne.s32.totalorder %s55, %s56
      %p70 = scmp.eq.s32.totalorder %s22, 3
      %p71 = por %p69, %p70
      %p73 = scmp.ne.s32.totalorder %s56, %s72
      %p74 = scmp.eq.s32.totalorder %s22, 0
      %p75 = por %p73, %p74
      %s77 = sadd.s32 %s76, 1
      %p80 = scmp.eq.s32.totalorder %s16, 3
      %p81 = scmp.ne.s32.totalorder %s76, %s78
      %p82 = scmp.eq.s32.totalorder %s16, 0
      %p83 = por %p81, %p82
      %p84 = scmp.ne.s32.totalorder %s76, %s78
      %p85 = scmp.eq.s32.totalorder %s21, 3
      %p86 = por %p84, %p85
      %p87 = scmp.ne.s32.totalorder %s78, %s79
      %p88 = scmp.eq.s32.totalorder %s21, 0
      %p89 = por %p87, %p88
      %p90 = scmp.ne.s32.totalorder %s78, %s79
      %p91 = scmp.eq.s32.totalorder %s22, 3
      %p92 = por %p90, %p91
      %p94 = scmp.ne.s32.totalorder %s79, %s93
      %p95 = scmp.eq.s32.totalorder %s22, 0
      %p96 = por %p94, %p95
      %s98 = sadd.s32 %s97, 1
      %p101 = scmp.eq.s32.totalorder %s16, 3
      %p102 = scmp.ne.s32.totalorder %s97, %s99
      %p103 = scmp.eq.s32.totalorder %s16, 0
      %p104 = por %p102, %p103
      %p105 = scmp.ne.s32.totalorder %s97, %s99
      %p106 = scmp.eq.s32.totalorder %s21, 3
      %p107 = por %p105, %p106
      %p108 = scmp.ne.s32.totalorder %s99, %s100
      %p109 = scmp.eq.s32.totalorder %s21, 0
      %p110 = por %p108, %p109
      %p111 = scmp.ne.s32.totalorder %s99, %s100
      %p112 = scmp.eq.s32.totalorder %s22, 3
      %p113 = por %p111, %p112
      %p115 = scmp.ne.s32.totalorder %s100, %s114
      %p116 = scmp.eq.s32.totalorder %s22, 0
      %p117 = por %p115, %p116
      %s118 = ssub.s32 %s16, %s23
      %p119 = scmp.eq.s32.totalorder %s118, 0
      %s121 = sadd.s32 %s120, 1
      %s122 = scalar_select %p119, %s120, %s121
      %p125 = pneg %p119
      %p126 = scmp.eq.s32.totalorder %s16, 3
      %p127 = por %p125, %p126
      %p128 = scmp.ne.s32.totalorder %s120, %s123
      %p129 = scmp.eq.s32.totalorder %s16, 0
      %p130 = por %p128, %p129
      %p131 = scmp.ne.s32.totalorder %s120, %s123
      %p132 = scmp.eq.s32.totalorder %s21, 3
      %p133 = por %p131, %p132
      %p134 = scmp.ne.s32.totalorder %s123, %s124
      %p135 = scmp.eq.s32.totalorder %s21, 0
      %p136 = por %p134, %p135
      %p137 = scmp.ne.s32.totalorder %s123, %s124
      %p138 = scmp.eq.s32.totalorder %s22, 3
      %p139 = por %p137, %p138
      %p141 = scmp.ne.s32.totalorder %s124, %s140
      %p142 = scmp.eq.s32.totalorder %s22, 0
      %p143 = por %p141, %p142
      %p144 = scmp.le.s32.totalorder 1, %s16
      %p145 = scmp.lt.s32.totalorder %s16, 5
      %p146 = pnand %p144, %p145
      %p147 = pneg %p146
      // Predicated region
      $region9: #{ridge_regression_loss.1} parent=5 // pred_check
        _
      $region10: #{ridge_regression_loss.1} parent=5 // pred_check_branch
        %149 = sbr.rel (%p146) target = $region12
      $region11: #{ridge_regression_loss.1} parent=5 // pred_region
        %s150 = ssub.s32 %s16, 1
        // Predicated region
        $region13: #{ridge_regression_loss.1} parent=11 // pred_check
          %p151 = pneg %p89
        $region14: #{ridge_regression_loss.1} parent=11 // pred_check_branch
          %153 = sbr.rel (%p151) target = $region16
        $region15: #{ridge_regression_loss.1} parent=11 // pred_region
          %s155 = ssub.s32 8192, 8192
          %156 = vsyncadd [#allocation5], %s155
          %s157 = sshll.u32 [#allocation6], 4
          %s158 = int_to_ptr.vmem [resolvable:$true] %s157
          %163 = dma.hbm_to_vmem [thread:$0]  %s2, 8192, %s158, [#allocation5], 256, 256, 16
        $region16: #{ridge_regression_loss.1} parent=11 // pred_fallthru
          _
        // Predicated region
        $region17: #{ridge_regression_loss.1} parent=11 // pred_check
          %p164 = pneg %p110
        $region18: #{ridge_regression_loss.1} parent=11 // pred_check_branch
          %166 = sbr.rel (%p164) target = $region20
        $region19: #{ridge_regression_loss.1} parent=11 // pred_region
          _
        $region20: #{ridge_regression_loss.1} parent=11 // pred_fallthru
          _
      $region12: #{ridge_regression_loss.1} parent=5 // pred_fallthru
        _
      %p167 = scmp.lt.s32.totalorder %s16, 4
      // Predicated region
      $region21: #{ridge_regression_loss.1} parent=5 // pred_check
        %p168 = pneg %p167
      $region22: #{ridge_regression_loss.1} parent=5 // pred_check_branch
        %170 = sbr.rel (%p168) target = $region24
      $region23: #{ridge_regression_loss.1} parent=5 // pred_region
        // Predicated region
        $region25: #{ridge_regression_loss.1} parent=23 // pred_check
          %p171 = pneg %p36
        $region26: #{ridge_regression_loss.1} parent=23 // pred_check_branch
          %173 = sbr.rel (%p171) target = $region28
        $region27: #{ridge_regression_loss.1} parent=23 // pred_region
          %s174 = sand.u32 %s26, 1
          %s175 = scalar_lea.sflag [#allocation3], %s174
          %s176 = sand.u32 %s26, 1
          %s177 = smul.addr %s176, 16
          %s178 = scalar_lea.vmem [#allocation2], %s177
          %s180 = ssub.s32 256, 256
          %181 = vsyncadd %s175, %s180
          %s182 = smul.addr %s16, 2
          %s183 = smul.addr %s182, 128
          %s184 = scalar_lea.hbm %s0, %s183
          %s186 = sshll.u32 %s178, 4
          %s187 = int_to_ptr.vmem [resolvable:$true] %s186
          %189 = dma.hbm_to_vmem [thread:$0]  %s184, 256, %s187, %s175
        $region28: #{ridge_regression_loss.1} parent=23 // pred_fallthru
          _
        // Predicated region
        $region29: #{ridge_regression_loss.1} parent=23 // pred_check
          %p190 = pneg %p62
        $region30: #{ridge_regression_loss.1} parent=23 // pred_check_branch
          %192 = sbr.rel (%p190) target = $region32
        $region31: #{ridge_regression_loss.1} parent=23 // pred_region
          %s193 = sand.u32 %s16, 1
          %s194 = scalar_lea.sflag [#allocation5], %s193
          %s195 = sand.u32 %s52, 1
          %s196 = smul.addr %s195, 16
          %s197 = scalar_lea.vmem [#allocation4], %s196
          %s199 = ssub.s32 256, 256
          %200 = vsyncadd %s194, %s199
          %s201 = smul.addr %s16, 2
          %s202 = smul.addr %s201, 128
          %s203 = scalar_lea.hbm %s1, %s202
          %s205 = sshll.u32 %s197, 4
          %s206 = int_to_ptr.vmem [resolvable:$true] %s205
          %208 = dma.hbm_to_vmem [thread:$0]  %s203, 256, %s206, %s194
        $region32: #{ridge_regression_loss.1} parent=23 // pred_fallthru
          _
      $region24: #{ridge_regression_loss.1} parent=5 // pred_fallthru
        _
      %p209 = scmp.le.s32.totalorder 1, %s16
      %p210 = scmp.lt.s32.totalorder %s16, 5
      %p211 = pnand %p209, %p210
      %p212 = pneg %p211
      // Predicated region
      $region33: #{ridge_regression_loss.1} parent=5 // pred_check
        _
      $region34: #{ridge_regression_loss.1} parent=5 // pred_check_branch
        %214 = sbr.rel (%p211) target = $region36
      $region35: #{ridge_regression_loss.1} parent=5 // pred_region
        %s215 = ssub.s32 %s16, 1
        %s216 = sand.u32 %s29, 1
        %s217 = scalar_lea.sflag [#allocation3], %s216
        %s218 = sand.u32 %s29, 1
        %s219 = smul.addr %s218, 16
        %s220 = scalar_lea.vmem [#allocation2], %s219
        // Predicated region
        $region37: #{ridge_regression_loss.1} parent=35 // pred_check
          %p221 = pneg %p42
        $region38: #{ridge_regression_loss.1} parent=35 // pred_check_branch
          %223 = sbr.rel (%p221) target = $region40
        $region39: #{ridge_regression_loss.1} parent=35 // pred_region
          %224 = dma.done %s217, 256
        $region40: #{ridge_regression_loss.1} parent=35 // pred_fallthru
          _
        %s225 = sand.u32 %s21, 1
        %s226 = scalar_lea.sflag [#allocation5], %s225
        %s227 = sand.u32 %s55, 1
        %s228 = smul.addr %s227, 16
        %s229 = scalar_lea.vmem [#allocation4], %s228
        // Predicated region
        $region41: #{ridge_regression_loss.1} parent=35 // pred_check
          %p230 = pneg %p68
        $region42: #{ridge_regression_loss.1} parent=35 // pred_check_branch
          %232 = sbr.rel (%p230) target = $region44
        $region43: #{ridge_regression_loss.1} parent=35 // pred_region
          %233 = dma.done %s226, 256
        $region44: #{ridge_regression_loss.1} parent=35 // pred_fallthru
          _
        // Predicated region
        $region45: #{ridge_regression_loss.1} parent=35 // pred_check
          %p234 = pneg %p89
        $region46: #{ridge_regression_loss.1} parent=35 // pred_check_branch
          %236 = sbr.rel (%p234) target = $region48
        $region47: #{ridge_regression_loss.1} parent=35 // pred_region
          %237 = dma.done [#allocation5], 8192
        $region48: #{ridge_regression_loss.1} parent=35 // pred_fallthru
          _
        %s238 = sand.u32 %s29, 1
        %s239 = scalar_lea.sflag [#allocation3], %s238
        %s240 = sand.u32 %s29, 1
        %s241 = smul.addr %s240, 16
        %s242 = scalar_lea.vmem [#allocation2], %s241
        %p243 = pneg %p42
        %p244 = pneg %p39
        %s245 = sand.u32 %s21, 1
        %s246 = scalar_lea.sflag [#allocation5], %s245
        %s247 = sand.u32 %s55, 1
        %s248 = smul.addr %s247, 16
        %s249 = scalar_lea.vmem [#allocation4], %s248
        %p250 = pneg %p68
        %p251 = pneg %p65
        %p252 = pneg %p89
        %p253 = pneg %p86
        %p254 = pneg %p110
        %p255 = pneg %p107
        %p256 = pneg %p136
        %p257 = pneg %p133
        %p258 = scmp.lt.s32.totalorder %s21, 3
        %s259 = scalar_select %p258, %s21, 3
        %s260 = smul.addr %s259, 8
        %s261 = scalar_lea.vmem %s4, %s260
        %p262 = scmp.lt.s32.totalorder %s21, 3
        %s263 = scalar_select %p262, %s21, 3
        %s264 = smul.addr %s263, 8
        %s265 = scalar_lea.vmem %s4, %s264
        %v266 = vld [vmem:[%s220] sm:$0xff]
        %v267 = vld [vmem:[%s220 + $0x8] sm:$0xff]
        %v268 = vld [vmem:[#allocation6] sm:$0xff]
        %v269 = vld [vmem:[#allocation6 + $0x8] sm:$0xff]
        %v270 = vld [vmem:[#allocation6 + $0x10] sm:$0xff]
        %v271 = vld [vmem:[#allocation6 + $0x18] sm:$0xff]
        %v272 = vld [vmem:[#allocation6 + $0x20] sm:$0xff]
        %v273 = vld [vmem:[#allocation6 + $0x28] sm:$0xff]
        %v274 = vld [vmem:[#allocation6 + $0x30] sm:$0xff]
        %v275 = vld [vmem:[#allocation6 + $0x38] sm:$0xff]
        %v276 = vld [vmem:[#allocation6 + $0x40] sm:$0xff]
        %v277 = vld [vmem:[#allocation6 + $0x48] sm:$0xff]
        %v278 = vld [vmem:[#allocation6 + $0x50] sm:$0xff]
        %v279 = vld [vmem:[#allocation6 + $0x58] sm:$0xff]
        %v280 = vld [vmem:[#allocation6 + $0x60] sm:$0xff]
        %v281 = vld [vmem:[#allocation6 + $0x68] sm:$0xff]
        %v282 = vld [vmem:[#allocation6 + $0x70] sm:$0xff]
        %v283 = vld [vmem:[#allocation6 + $0x78] sm:$0xff]
        %v284 = vld [vmem:[#allocation6 + $0x80] sm:$0xff]
        %v285 = vld [vmem:[#allocation6 + $0x88] sm:$0xff]
        %v286 = vld [vmem:[#allocation6 + $0x90] sm:$0xff]
        %v287 = vld [vmem:[#allocation6 + $0x98] sm:$0xff]
        %v288 = vld [vmem:[#allocation6 + $0xa0] sm:$0xff]
        %v289 = vld [vmem:[#allocation6 + $0xa8] sm:$0xff]
        %v290 = vld [vmem:[#allocation6 + $0xb0] sm:$0xff]
        %v291 = vld [vmem:[#allocation6 + $0xb8] sm:$0xff]
        %v292 = vld [vmem:[#allocation6 + $0xc0] sm:$0xff]
        %v293 = vld [vmem:[#allocation6 + $0xc8] sm:$0xff]
        %v294 = vld [vmem:[#allocation6 + $0xd0] sm:$0xff]
        %v295 = vld [vmem:[#allocation6 + $0xd8] sm:$0xff]
        %v296 = vld [vmem:[#allocation6 + $0xe0] sm:$0xff]
        %v297 = vld [vmem:[#allocation6 + $0xe8] sm:$0xff]
        %v298 = vld [vmem:[#allocation6 + $0xf0] sm:$0xff]
        %v299 = vld [vmem:[#allocation6 + $0xf8] sm:$0xff]
        %v300 = vld [vmem:[#allocation6 + $0x100] sm:$0xff]
        %v301 = vld [vmem:[#allocation6 + $0x108] sm:$0xff]
        %v302 = vld [vmem:[#allocation6 + $0x110] sm:$0xff]
        %v303 = vld [vmem:[#allocation6 + $0x118] sm:$0xff]
        %v304 = vld [vmem:[#allocation6 + $0x120] sm:$0xff]
        %v305 = vld [vmem:[#allocation6 + $0x128] sm:$0xff]
        %v306 = vld [vmem:[#allocation6 + $0x130] sm:$0xff]
        %v307 = vld [vmem:[#allocation6 + $0x138] sm:$0xff]
        %v308 = vld [vmem:[#allocation6 + $0x140] sm:$0xff]
        %v309 = vld [vmem:[#allocation6 + $0x148] sm:$0xff]
        %v310 = vld [vmem:[#allocation6 + $0x150] sm:$0xff]
        %v311 = vld [vmem:[#allocation6 + $0x158] sm:$0xff]
        %v312 = vld [vmem:[#allocation6 + $0x160] sm:$0xff]
        %v313 = vld [vmem:[#allocation6 + $0x168] sm:$0xff]
        %v314 = vld [vmem:[#allocation6 + $0x170] sm:$0xff]
        %v315 = vld [vmem:[#allocation6 + $0x178] sm:$0xff]
        %v316 = vld [vmem:[#allocation6 + $0x180] sm:$0xff]
        %v317 = vld [vmem:[#allocation6 + $0x188] sm:$0xff]
        %v318 = vld [vmem:[#allocation6 + $0x190] sm:$0xff]
        %v319 = vld [vmem:[#allocation6 + $0x198] sm:$0xff]
        %v320 = vld [vmem:[#allocation6 + $0x1a0] sm:$0xff]
        %v321 = vld [vmem:[#allocation6 + $0x1a8] sm:$0xff]
        %v322 = vld [vmem:[#allocation6 + $0x1b0] sm:$0xff]
        %v323 = vld [vmem:[#allocation6 + $0x1b8] sm:$0xff]
        %v324 = vld [vmem:[#allocation6 + $0x1c0] sm:$0xff]
        %v325 = vld [vmem:[#allocation6 + $0x1c8] sm:$0xff]
        %v326 = vld [vmem:[#allocation6 + $0x1d0] sm:$0xff]
        %v327 = vld [vmem:[#allocation6 + $0x1d8] sm:$0xff]
        %v328 = vld [vmem:[#allocation6 + $0x1e0] sm:$0xff]
        %v329 = vld [vmem:[#allocation6 + $0x1e8] sm:$0xff]
        %v330 = vld [vmem:[#allocation6 + $0x1f0] sm:$0xff]
        %v331 = vld [vmem:[#allocation6 + $0x1f8] sm:$0xff]
        %v332 = vld [vmem:[%s3] sm:$0x3]
        %v334 = vlaneseq
        %v335 = vshrl.u32 %v334, 7
        %v336 = vsub.s32 0, %v335
        %v337 = vrot.slane %v332, %v336
        %v338 = vlaneseq
        %v339 = vshrl.u32 %v338, 7
        %v340 = vsub.s32 1, %v339
        %v341 = vrot.slane %v332, %v340
        %344 = vmatprep.subr.mxu0 %v299
        %345 = vmatpush1.xpose.msra.mxu0 %v298
        %346 = vmatprep.subr.mxu0 %v297
        %347 = vmatpush1.xpose.msra.mxu0 %v296
        %348 = vmatprep.subr.mxu0 %v295
        %349 = vmatpush1.xpose.msra.mxu0 %v294
        %350 = vmatprep.subr.mxu0 %v293
        %351 = vmatpush1.xpose.msra.mxu0 %v292
        %352 = vmatprep.subr.mxu0 %v291
        %353 = vmatpush1.xpose.msra.mxu0 %v290
        %354 = vmatprep.subr.mxu0 %v289
        %355 = vmatpush1.xpose.msra.mxu0 %v288
        %356 = vmatprep.subr.mxu0 %v287
        %357 = vmatpush1.xpose.msra.mxu0 %v286
        %358 = vmatprep.subr.mxu0 %v285
        %359 = vmatpush1.xpose.msra.mxu0 %v284
        %360 = vmatprep.subr.mxu0 %v283
        %361 = vmatpush1.xpose.msra.mxu0 %v282
        %362 = vmatprep.subr.mxu0 %v281
        %363 = vmatpush1.xpose.msra.mxu0 %v280
        %364 = vmatprep.subr.mxu0 %v279
        %365 = vmatpush1.xpose.msra.mxu0 %v278
        %366 = vmatprep.subr.mxu0 %v277
        %367 = vmatpush1.xpose.msra.mxu0 %v276
        %368 = vmatprep.subr.mxu0 %v275
        %369 = vmatpush1.xpose.msra.mxu0 %v274
        %370 = vmatprep.subr.mxu0 %v273
        %371 = vmatpush1.xpose.msra.mxu0 %v272
        %372 = vmatprep.subr.mxu0 %v271
        %373 = vmatpush1.xpose.msra.mxu0 %v270
        %374 = vmatprep.subr.mxu0 %v269
        %375 = vmatpush1.xpose.msra.mxu0 %v268
        %376 = vmatprep.subr.mxu0 %v331
        %377 = vmatpush2.xpose.msra.mxu0 %v330
        %378 = vmatprep.subr.mxu0 %v329
        %379 = vmatpush2.xpose.msra.mxu0 %v328
        %380 = vmatprep.subr.mxu0 %v327
        %381 = vmatpush2.xpose.msra.mxu0 %v326
        %382 = vmatprep.subr.mxu0 %v325
        %383 = vmatpush2.xpose.msra.mxu0 %v324
        %384 = vmatprep.subr.mxu0 %v323
        %385 = vmatpush2.xpose.msra.mxu0 %v322
        %386 = vmatprep.subr.mxu0 %v321
        %387 = vmatpush2.xpose.msra.mxu0 %v320
        %388 = vmatprep.subr.mxu0 %v319
        %389 = vmatpush2.xpose.msra.mxu0 %v318
        %390 = vmatprep.subr.mxu0 %v317
        %391 = vmatpush2.xpose.msra.mxu0 %v316
        %392 = vmatprep.subr.mxu0 %v315
        %393 = vmatpush2.xpose.msra.mxu0 %v314
        %394 = vmatprep.subr.mxu0 %v313
        %395 = vmatpush2.xpose.msra.mxu0 %v312
        %396 = vmatprep.subr.mxu0 %v311
        %397 = vmatpush2.xpose.msra.mxu0 %v310
        %398 = vmatprep.subr.mxu0 %v309
        %399 = vmatpush2.xpose.msra.mxu0 %v308
        %400 = vmatprep.subr.mxu0 %v307
        %401 = vmatpush2.xpose.msra.mxu0 %v306
        %402 = vmatprep.subr.mxu0 %v305
        %403 = vmatpush2.xpose.msra.mxu0 %v304
        %404 = vmatprep.subr.mxu0 %v303
        %405 = vmatpush2.xpose.msra.mxu0 %v302
        %406 = vmatprep.subr.mxu0 %v301
        %407 = vmatpush2.xpose.msra.mxu0 %v300
        %408 = vmatprep.mubr.f32.mxu0 %v267
        %409 = vmatmul.mubr.f32.gmra.mxu0 %v266
        %v410 = vpop.f32.mrf.mxu0
        %v411 = vadd.f32 %v337, %v410
        %v412 = vpop.f32.mrf.mxu0
        %v413 = vadd.f32 %v341, %v412
        %414 = vdwg.mxu0
        %v415 = vld [vmem:[%s229] sm:$0xff]
        %v416 = vld [vmem:[%s229 + $0x8] sm:$0xff]
        %v417 = vsub.f32 %v411, %v415
        %v418 = vsub.f32 %v413, %v416
        %v419 = vmul.f32 %v417, %v417
        %v420 = vmul.f32 %v418, %v418
        %v421 = vadd.f32 %v419, %v420
        %422 = vadd.xlane.f32.xlu0 %v421
        %v423 = vpop.xlane.xlu0 %422
        %v424 = vrot.slane %v423, 4
        %v425 = vadd.f32 %v423, %v424
        %v426 = vrot.slane %v425, 2
        %v427 = vadd.f32 %v425, %v426
        %v428 = vrot.slane %v427, 1
        %v429 = vadd.f32 %v427, %v428
        %s430 = vtos %v429
        %v431 = vstv %s430
        %432 = vst [vmem:[%s265] sm:$0xff] %v431
        %p433 = scmp.lt.s32.totalorder %s21, 3
        %s434 = scalar_select %p433, %s21, 3
        %s435 = smul.addr %s434, 8
        %s436 = scalar_lea.vmem %s4, %s435
        // Predicated region
        $region49: #{ridge_regression_loss.1} parent=35 // pred_check
          %p437 = pneg %p133
        $region50: #{ridge_regression_loss.1} parent=35 // pred_check_branch
          %439 = sbr.rel (%p437) target = $region52
        $region51: #{ridge_regression_loss.1} parent=35 // pred_region
          _
        $region52: #{ridge_regression_loss.1} parent=35 // pred_fallthru
          _
      $region36: #{ridge_regression_loss.1} parent=5 // pred_fallthru
        _
      %p440 = scmp.le.s32.totalorder 2, %s16
      // Predicated region
      $region53: #{ridge_regression_loss.1} parent=5 // pred_check
        %p441 = pneg %p440
      $region54: #{ridge_regression_loss.1} parent=5 // pred_check_branch
        %443 = sbr.rel (%p441) target = $region56
      $region55: #{ridge_regression_loss.1} parent=5 // pred_region
        %s444 = ssub.s32 %s16, 2
        // Predicated region
        $region57: #{ridge_regression_loss.1} parent=55 // pred_check
          %p445 = pneg %p139
        $region58: #{ridge_regression_loss.1} parent=55 // pred_check_branch
          %447 = sbr.rel (%p445) target = $region60
        $region59: #{ridge_regression_loss.1} parent=55 // pred_region
          %p448 = scmp.lt.s32.totalorder %s22, 3
          %s449 = scalar_select %p448, %s22, 3
          %s450 = smul.addr %s449, 8
          %s451 = scalar_lea.vmem %s4, %s450
        $region60: #{ridge_regression_loss.1} parent=55 // pred_fallthru
          _
      $region56: #{ridge_regression_loss.1} parent=5 // pred_fallthru
        _
    $region6: #{ridge_regression_loss.1} parent=1 // loop_footer
      %s20 = sadd.s32 1, %s16
    $region7: #{ridge_regression_loss.1} parent=1 // loop_footer_branch
      %15 = sbr.rel target = $region3
    $region8: #{ridge_regression_loss.1} parent=1 // loop_exit
      _
    %452 = vsyncpa [#allocation3], 1
    %s453 = scalar_lea.sflag [#allocation3], 1
    %454 = vsyncpa %s453, 1
    %455 = vsyncpa [#allocation5], 1
    %s456 = scalar_lea.sflag [#allocation5], 1
    %457 = vsyncpa %s456, 1

</llo_original>
